<compile_context>
chip_gen: v6e
topology: v6e:2x2x1
jax: 0.10.0
libtpu: 0.0.40
codegen_flags: <defaults>
</compile_context>

<pallas_src>
import math
import functools

import jax
import jax.numpy as jnp
from jax.experimental import pallas as pl
from jax.experimental.pallas import tpu as pltpu


_SUPPORTED = ("relu", "tanh", "swish", "gelu", "leakyrelu")
_MIN_PALLAS_BYTES = 1 << 20      # below this, inline jnp beats a pallas launch
_LANE = 128                      # TPU vreg lane width
_RELANE_WIDTH = 1024             # lane width used when we must re-pack


# ---------------------------------------------------------------------------
# Activation math (shared by kernel, tiny-input fast path and reference)
# ---------------------------------------------------------------------------
def _apply_activation(x, act):
    if act == "relu":
        return jnp.maximum(x, jnp.zeros_like(x))
    if act == "tanh":
        return jnp.tanh(x)
    if act == "swish":
        return x * jax.nn.sigmoid(x)
    if act == "gelu":
        # gelu_new (BERT/GPT tanh approximation)
        c = math.sqrt(2.0 / math.pi)
        return 0.5 * x * (1.0 + jnp.tanh(c * (x + 0.044715 * (x * x * x))))
    if act == "leakyrelu":
        # torch default negative_slope = 0.01
        return jnp.where(x >= 0, x, 0.01 * x)
    raise ValueError(f"unsupported activation: {act}")


# ---------------------------------------------------------------------------
# Kernel (pure VPU/EUP elementwise work on one VMEM block)
# ---------------------------------------------------------------------------
def _activation_kernel(x_ref, o_ref, *, act):
    o_ref[...] = _apply_activation(x_ref[...], act).astype(o_ref.dtype)


# ---------------------------------------------------------------------------
# Generation-aware budgets
# ---------------------------------------------------------------------------
def _vmem_capacity_bytes() -> int:
    try:
        info = pltpu.get_tpu_info()
        cap = getattr(info, "vmem_capacity_bytes", None)
        if cap:
            return int(cap)
    except Exception:
        pass
    return 64 << 20  # conservative fallback (v7x per-TC VMEM)


def _block_and_vmem_budget():
    vmem = _vmem_capacity_bytes()
    # ~8 MiB blocks on 64 MiB VMEM (v7x), ~16 MiB on 128 MiB (v5e/v6e).
    block_bytes = max(4 << 20, min(16 << 20, vmem // 8))
    resident = 4 * block_bytes                      # in + out, double-buffered
    vmem_limit = min(resident + (16 << 20), (vmem * 3) // 4)
    return block_bytes, int(vmem_limit)


# ---------------------------------------------------------------------------
# Tiling helpers
# ---------------------------------------------------------------------------
def _sublane_multiple(dtype) -> int:
    itemsize = jnp.dtype(dtype).itemsize
    if itemsize >= 4:
        return 8
    if itemsize == 2:
        return 16
    return 32


def _choose_block_rows(rows: int, lane: int, dtype, block_bytes: int,
                       total_bytes: int) -> int:
    packing = _sublane_multiple(dtype)
    row_bytes = lane * jnp.dtype(dtype).itemsize
    cap = max(1, block_bytes // row_bytes)

    # Guarantee >= 2 (>= 4 for big tensors) grid steps so both v7x
    # TensorCores contribute HBM bandwidth on this mem-bound kernel.
    desired_steps = 4 if total_bytes >= (8 << 20) else 2
    if rows // desired_steps >= packing:
        cap = min(cap, rows // desired_steps)

    if cap >= rows:
        return rows  # single full-extent block (always a legal block shape)

    block_rows = max(packing, (cap // packing) * packing)
    block_rows = min(block_rows, rows)

    # Prefer a block_rows that divides rows exactly -> no masked tail block.
    if rows % block_rows != 0:
        cand = block_rows
        for _ in range(64):
            cand -= packing
            if cand < packing:
                break
            if rows % cand == 0:
                return cand
    return block_rows


# ---------------------------------------------------------------------------
# Wrapper (the nn.Module equivalent)
# ---------------------------------------------------------------------------
class ActivationFunctionPallas:
    """Pallas equivalent of Activation_Function_Class: y = f(x), elementwise."""

    def __init__(self, hidden_act: str):
        act = hidden_act.lower()
        if act not in _SUPPORTED:
            raise ValueError(f"unsupported activation: {hidden_act}")
        self.act = act

    def __call__(self, x: jax.Array) -> jax.Array:
        orig_shape = x.shape
        total = int(x.size)
        if total == 0:
            return x
        itemsize = jnp.dtype(x.dtype).itemsize
        total_bytes = total * itemsize

        # Tiny inputs: plain jnp, XLA fuses it with neighbours for free.
        if x.ndim == 0 or total_bytes < _MIN_PALLAS_BYTES:
            return _apply_activation(x, self.act)

        hidden = orig_shape[-1]
        if hidden % _LANE == 0:
            # Layout-free: collapse leading dims only (physical (8,128) tiling
            # of the minor dim is preserved -> no HBM relayout copies).
            lane = hidden
            rows = total // hidden
            x2d = x.reshape(rows, lane)
            pad = 0
        else:
            # Re-pack to a lane-dense slab: flatten, pad to a multiple of the
            # re-lane width, slice the result afterwards. Avoids <128-lane
            # output blocks (masked vst.msk partial stores).
            lane = _RELANE_WIDTH
            padded = ((total + lane - 1) // lane) * lane
            pad = padded - total
            flat = x.reshape(-1)
            if pad:
                flat = jnp.pad(flat, (0, pad))
            rows = padded // lane
            x2d = flat.reshape(rows, lane)

        block_bytes, vmem_limit = _block_and_vmem_budget()
        block_rows = _choose_block_rows(rows, lane, x.dtype, block_bytes,
                                        total_bytes)
        grid = (pl.cdiv(rows, block_rows),)

        kernel = functools.partial(_activation_kernel, act=self.act)

        out2d = pl.pallas_call(
            kernel,
            out_shape=jax.ShapeDtypeStruct((rows, lane), x.dtype),
            grid=grid,
            in_specs=[pl.BlockSpec((block_rows, lane), lambda i: (i, 0))],
            out_specs=pl.BlockSpec((block_rows, lane), lambda i: (i, 0)),
            compiler_params=pltpu.CompilerParams(
                dimension_semantics=("parallel",),
                vmem_limit_bytes=vmem_limit,
            ),
        )(x2d)

        if pad:
            return out2d.reshape(-1)[:total].reshape(orig_shape)
        return out2d.reshape(orig_shape)


# ---------------------------------------------------------------------------
# Self-test
# ---------------------------------------------------------------------------
if __name__ == "__main__":
    key = jax.random.PRNGKey(0)
    k1, k2, k3 = jax.random.split(key, 3)

    test_inputs = [
        # Adapter-sized activation (module's typical use): tiny -> jnp path.
        jax.random.normal(k1, (2, 8, 32), dtype=jnp.float32),
        # 128-aligned hidden -> layout-free collapse + Pallas kernel.
        jax.random.normal(k2, (4, 256, 384), dtype=jnp.float32),
        # Non-128-aligned hidden -> padded lane-dense re-pack + Pallas kernel.
        jax.random.normal(k3, (8, 512, 100), dtype=jnp.float32),
    ]

    ok = True
    for act in _SUPPORTED:
        mod = ActivationFunctionPallas(act)
        for x in test_inputs:
            y = mod(x)
            jax.block_until_ready(y)
            y_ref = _apply_activation(x, act)
            if y.shape != x.shape or not jnp.allclose(y, y_ref,
                                                      atol=1e-5, rtol=1e-5):
                ok = False
                print(f"MISMATCH act={act} shape={x.shape}: max err "
                      f"{float(jnp.max(jnp.abs(y - y_ref)))}")

    if ok:
        print("KERNEL_OK")
</pallas_src>

<mosaic_0001>
module attributes {stable_mosaic.version = 11 : i64} {
  func.func @_activation_kernel(%arg0: i32, %arg1: memref<512x384xf32, #tpu.memory_space<vmem>>, %arg2: memref<512x384xf32, #tpu.memory_space<vmem>>) attributes {dimension_semantics = [#tpu.dimension_semantics<parallel>], iteration_bounds = array<i64: 2>, scalar_prefetch = 0 : i64, scratch_operands = 0 : i64, tpu.core_type = #tpu.core_type<tc>, window_params = [{transform_indices = @transform_0, window_bounds = array<i64: 512, 384>}, {transform_indices = @transform_1, window_bounds = array<i64: 512, 384>}]} {
    %c0 = arith.constant 0 : index
    %c0_0 = arith.constant 0 : index
    %0 = vector.load %arg1[%c0, %c0_0] : memref<512x384xf32, #tpu.memory_space<vmem>>, vector<512x384xf32>
    %cst = arith.constant 0.000000e+00 : f32
    %1 = vector.broadcast %cst : f32 to vector<512x384xf32>
    %2 = arith.maximumf %0, %1 : vector<512x384xf32>
    %c0_1 = arith.constant 0 : index
    %c0_2 = arith.constant 0 : index
    %3 = vector.load %arg2[%c0_1, %c0_2] : memref<512x384xf32, #tpu.memory_space<vmem>>, vector<512x384xf32>
    tpu.vector_store %arg2[%c0_1, %c0_2], %2 {strides = array<i32>} : memref<512x384xf32, #tpu.memory_space<vmem>>, vector<512x384xf32>,
    return
  }
  func.func @transform_0(%arg0: i32) -> (i32, i32) {
    %c0_i32 = arith.constant 0 : i32
    %c0_i32_0 = arith.constant 0 : i32
    return %arg0, %c0_i32 : i32, i32
  }
  func.func @transform_1(%arg0: i32) -> (i32, i32) {
    %c0_i32 = arith.constant 0 : i32
    %c0_i32_0 = arith.constant 0 : i32
    return %arg0, %c0_i32 : i32, i32
  }
}

</mosaic_0001>

<llo_original>
// kernel: tpu_custom_call.1
$region0: #{tpu_custom_call.1}
  #allocation0 [shape = 'u32[]', space=smem, size = 0x4, offset = 0x4, fixed_abs, tag = 'smem constant byte address 0x4 - core index']
  #allocation1 [shape = 'u32[144,128]{1,0:T(1,128)}', space=vmem, size = 0x12000, scoped, tag = 'internal scratch']
  %s0 = inlined_call_operand.hbm [shape: f32[1024,384], index: 0, kind: input, shape index: {}]
  %s1 = inlined_call_operand.hbm [shape: f32[1024,384], index: 1, kind: output, shape index: {}]
  %s2 = sld [smem:[#allocation0]]
  $region41: #{tpu_custom_call.1} parent=0
    _
  %s4 = ssub.s32 1, %s2
  %s5 = scalar_select 0, %s4, %s2
  $region1: #{tpu_custom_call.1} parent=0
    #allocation2 [shape = 'u8[1572864]{0}', space=vmem, size = 0x180000, scoped, tag = 'input window, operand 0']
    #allocation3 [shape = 's32[2]{0}', space=sflag, size = 0x8, scoped, tag = 'scoped memory for tpu_custom_call.1']
    #allocation4 [shape = 's32[2]{0}', space=sflag, size = 0x8, scoped, tag = 'scoped memory for tpu_custom_call.1']
    #allocation5 [shape = 'u8[1572864]{0}', space=vmem, size = 0x180000, scoped, tag = 'output window, operand 0']
    %6 = vsyncpa [#allocation3], 0
    %s7 = scalar_lea.sflag [#allocation3], 1
    %8 = vsyncpa %s7, 0
    %9 = vsyncpa [#allocation4], 0
    %s10 = scalar_lea.sflag [#allocation4], 1
    %11 = vsyncpa %s10, 0
    loop: start=0, step=1, limit=4
    $region2: #{tpu_custom_call.1} parent=1 // loop_pre_header
      _
    $region3: #{tpu_custom_call.1} parent=1 // loop_header
      %s13 = sphi 0, %s17
      %p14 = scmp.ge.s32.totalorder %s13, 4
      %s23 = sphi 0, %s25
      %s26 = sphi 0, %s23
      %s27 = sphi 0, %s26
      %s43 = sphi 0, %s27
      %s49 = sphi 0, %s51
      %s52 = sphi 0, %s49
      %s53 = sphi 0, %s52
      %s69 = sphi 0, %s53
    $region4: #{tpu_custom_call.1} parent=1 // loop_header_branch
      %16 = sbr.rel (%p14) target = $region8
    $region5: #{tpu_custom_call.1} parent=1 // loop_body
      %s18 = ssub.s32 %s13, 1
      %s19 = ssub.s32 %s13, 2
      %s20 = sadd.s32 %s13, 1
      %s21 = ssub.s32 %s13, %s20
      %p22 = scmp.eq.s32.totalorder %s21, 0
      %s24 = sadd.s32 %s23, 1
      %s25 = scalar_select %p22, %s23, %s24
      %p28 = pneg %p22
      %p29 = scmp.eq.s32.totalorder %s13, 1
      %p30 = por %p28, %p29
      %p31 = scmp.ne.s32.totalorder %s23, %s26
      %p32 = scmp.eq.s32.totalorder %s13, 0
      %p33 = por %p31, %p32
      %p34 = scmp.ne.s32.totalorder %s23, %s26
      %p35 = scmp.eq.s32.totalorder %s18, 1
      %p36 = por %p34, %p35
      %p37 = scmp.ne.s32.totalorder %s26, %s27
      %p38 = scmp.eq.s32.totalorder %s18, 0
      %p39 = por %p37, %p38
      %p40 = scmp.ne.s32.totalorder %s26, %s27
      %p41 = scmp.eq.s32.totalorder %s19, 1
      %p42 = por %p40, %p41
      %p44 = scmp.ne.s32.totalorder %s27, %s43
      %p45 = scmp.eq.s32.totalorder %s19, 0
      %p46 = por %p44, %p45
      %s47 = ssub.s32 %s13, %s20
      %p48 = scmp.eq.s32.totalorder %s47, 0
      %s50 = sadd.s32 %s49, 1
      %s51 = scalar_select %p48, %s49, %s50
      %p54 = pneg %p48
      %p55 = scmp.eq.s32.totalorder %s13, 1
      %p56 = por %p54, %p55
      %p57 = scmp.ne.s32.totalorder %s49, %s52
      %p58 = scmp.eq.s32.totalorder %s13, 0
      %p59 = por %p57, %p58
      %p60 = scmp.ne.s32.totalorder %s49, %s52
      %p61 = scmp.eq.s32.totalorder %s18, 1
      %p62 = por %p60, %p61
      %p63 = scmp.ne.s32.totalorder %s52, %s53
      %p64 = scmp.eq.s32.totalorder %s18, 0
      %p65 = por %p63, %p64
      %p66 = scmp.ne.s32.totalorder %s52, %s53
      %p67 = scmp.eq.s32.totalorder %s19, 1
      %p68 = por %p66, %p67
      %p70 = scmp.ne.s32.totalorder %s53, %s69
      %p71 = scmp.eq.s32.totalorder %s19, 0
      %p72 = por %p70, %p71
      %p73 = scmp.le.s32.totalorder 1, %s13
      %p74 = scmp.lt.s32.totalorder %s13, 3
      %p75 = pnand %p73, %p74
      %p76 = pneg %p75
      // Predicated region
      $region9: #{tpu_custom_call.1} parent=5 // pred_check
        _
      $region10: #{tpu_custom_call.1} parent=5 // pred_check_branch
        %78 = sbr.rel (%p75) target = $region12
      $region11: #{tpu_custom_call.1} parent=5 // pred_region
        %s79 = ssub.s32 %s13, 1
      $region12: #{tpu_custom_call.1} parent=5 // pred_fallthru
        _
      %p80 = scmp.lt.s32.totalorder %s13, 2
      // Predicated region
      $region13: #{tpu_custom_call.1} parent=5 // pred_check
        %p81 = pneg %p80
      $region14: #{tpu_custom_call.1} parent=5 // pred_check_branch
        %83 = sbr.rel (%p81) target = $region16
      $region15: #{tpu_custom_call.1} parent=5 // pred_region
        // Predicated region
        $region17: #{tpu_custom_call.1} parent=15 // pred_check
          %p84 = pneg %p33
        $region18: #{tpu_custom_call.1} parent=15 // pred_check_branch
          %86 = sbr.rel (%p84) target = $region20
        $region19: #{tpu_custom_call.1} parent=15 // pred_region
          %s87 = sand.u32 %s23, 1
          %s88 = scalar_lea.sflag [#allocation3], %s87
          %s89 = sand.u32 %s23, 1
          %s90 = smul.addr %s89, 1536
          %s91 = scalar_lea.vmem [#allocation2], %s90
          %s92 = smul.u32 64, %s13
          %s94 = ssub.s32 24576, 24576
          %95 = vsyncadd %s88, %s94
          %s96 = smul.addr %s92, 3
          %s97 = smul.addr %s96, 128
          %s98 = scalar_lea.hbm %s0, %s97
          %s99 = sshll.u32 %s91, 4
          %s100 = int_to_ptr.vmem [resolvable:$true] %s99
          %105 = dma.hbm_to_vmem [thread:$0]  %s98, 24576, %s100, %s88, 384, 384, 24
        $region20: #{tpu_custom_call.1} parent=15 // pred_fallthru
          _
      $region16: #{tpu_custom_call.1} parent=5 // pred_fallthru
        _
      %p106 = scmp.le.s32.totalorder 1, %s13
      %p107 = scmp.lt.s32.totalorder %s13, 3
      %p108 = pnand %p106, %p107
      %p109 = pneg %p108
      // Predicated region
      $region21: #{tpu_custom_call.1} parent=5 // pred_check
        _
      $region22: #{tpu_custom_call.1} parent=5 // pred_check_branch
        %111 = sbr.rel (%p108) target = $region24
      $region23: #{tpu_custom_call.1} parent=5 // pred_region
        %s112 = ssub.s32 %s13, 1
        %s113 = sand.u32 %s26, 1
        %s114 = scalar_lea.sflag [#allocation3], %s113
        %s115 = sand.u32 %s26, 1
        %s116 = smul.addr %s115, 1536
        %s117 = scalar_lea.vmem [#allocation2], %s116
        // Predicated region
        $region25: #{tpu_custom_call.1} parent=23 // pred_check
          %p118 = pneg %p39
        $region26: #{tpu_custom_call.1} parent=23 // pred_check_branch
          %120 = sbr.rel (%p118) target = $region28
        $region27: #{tpu_custom_call.1} parent=23 // pred_region
          %121 = dma.done %s114, 24576
        $region28: #{tpu_custom_call.1} parent=23 // pred_fallthru
          _
        %s122 = sand.u32 %s26, 1
        %s123 = scalar_lea.sflag [#allocation3], %s122
        %s124 = sand.u32 %s26, 1
        %s125 = smul.addr %s124, 1536
        %s126 = scalar_lea.vmem [#allocation2], %s125
        %p127 = pneg %p39
        %p128 = pneg %p36
        %p129 = pneg %p65
        %p130 = pneg %p62
        %s131 = sand.u32 %s52, 1
        %s132 = scalar_lea.sflag [#allocation4], %s131
        %s133 = sand.u32 %s52, 1
        %s134 = smul.addr %s133, 1536
        %s135 = scalar_lea.vmem [#allocation5], %s134
        %s136 = smul.u32 64, %s18
        %s137 = smul.u32 64, %s18
        %v138 = vld [vmem:[%s117] sm:$0xff]
        %v139 = vld [vmem:[%s117 + $0x8] sm:$0xff]
        %v140 = vld [vmem:[%s117 + $0x10] sm:$0xff]
        %v141 = vld [vmem:[%s117 + $0x18] sm:$0xff]
        %v142 = vld [vmem:[%s117 + $0x20] sm:$0xff]
        %v143 = vld [vmem:[%s117 + $0x28] sm:$0xff]
        %v144 = vld [vmem:[%s117 + $0x30] sm:$0xff]
        %v145 = vld [vmem:[%s117 + $0x38] sm:$0xff]
        %v146 = vld [vmem:[%s117 + $0x40] sm:$0xff]
        %v147 = vld [vmem:[%s117 + $0x48] sm:$0xff]
        %v148 = vld [vmem:[%s117 + $0x50] sm:$0xff]
        %v149 = vld [vmem:[%s117 + $0x58] sm:$0xff]
        %v150 = vld [vmem:[%s117 + $0x60] sm:$0xff]
        %v151 = vld [vmem:[%s117 + $0x68] sm:$0xff]
        %v152 = vld [vmem:[%s117 + $0x70] sm:$0xff]
        %v153 = vld [vmem:[%s117 + $0x78] sm:$0xff]
        %v154 = vld [vmem:[%s117 + $0x80] sm:$0xff]
        %v155 = vld [vmem:[%s117 + $0x88] sm:$0xff]
        %v156 = vld [vmem:[%s117 + $0x90] sm:$0xff]
        %v157 = vld [vmem:[%s117 + $0x98] sm:$0xff]
        %v158 = vld [vmem:[%s117 + $0xa0] sm:$0xff]
        %v159 = vld [vmem:[%s117 + $0xa8] sm:$0xff]
        %v160 = vld [vmem:[%s117 + $0xb0] sm:$0xff]
        %v161 = vld [vmem:[%s117 + $0xb8] sm:$0xff]
        %v162 = vld [vmem:[%s117 + $0xc0] sm:$0xff]
        %v163 = vld [vmem:[%s117 + $0xc8] sm:$0xff]
        %v164 = vld [vmem:[%s117 + $0xd0] sm:$0xff]
        %v165 = vld [vmem:[%s117 + $0xd8] sm:$0xff]
        %v166 = vld [vmem:[%s117 + $0xe0] sm:$0xff]
        %v167 = vld [vmem:[%s117 + $0xe8] sm:$0xff]
        %v168 = vld [vmem:[%s117 + $0xf0] sm:$0xff]
        %v169 = vld [vmem:[%s117 + $0xf8] sm:$0xff]
        %v170 = vld [vmem:[%s117 + $0x100] sm:$0xff]
        %v171 = vld [vmem:[%s117 + $0x108] sm:$0xff]
        %v172 = vld [vmem:[%s117 + $0x110] sm:$0xff]
        %v173 = vld [vmem:[%s117 + $0x118] sm:$0xff]
        %v174 = vld [vmem:[%s117 + $0x120] sm:$0xff]
        %v175 = vld [vmem:[%s117 + $0x128] sm:$0xff]
        %v176 = vld [vmem:[%s117 + $0x130] sm:$0xff]
        %v177 = vld [vmem:[%s117 + $0x138] sm:$0xff]
        %v178 = vld [vmem:[%s117 + $0x140] sm:$0xff]
        %v179 = vld [vmem:[%s117 + $0x148] sm:$0xff]
        %v180 = vld [vmem:[%s117 + $0x150] sm:$0xff]
        %v181 = vld [vmem:[%s117 + $0x158] sm:$0xff]
        %v182 = vld [vmem:[%s117 + $0x160] sm:$0xff]
        %v183 = vld [vmem:[%s117 + $0x168] sm:$0xff]
        %v184 = vld [vmem:[%s117 + $0x170] sm:$0xff]
        %v185 = vld [vmem:[%s117 + $0x178] sm:$0xff]
        %v186 = vld [vmem:[%s117 + $0x180] sm:$0xff]
        %v187 = vld [vmem:[%s117 + $0x188] sm:$0xff]
        %v188 = vld [vmem:[%s117 + $0x190] sm:$0xff]
        %v189 = vld [vmem:[%s117 + $0x198] sm:$0xff]
        %v190 = vld [vmem:[%s117 + $0x1a0] sm:$0xff]
        %v191 = vld [vmem:[%s117 + $0x1a8] sm:$0xff]
        %v192 = vld [vmem:[%s117 + $0x1b0] sm:$0xff]
        %v193 = vld [vmem:[%s117 + $0x1b8] sm:$0xff]
        %v194 = vld [vmem:[%s117 + $0x1c0] sm:$0xff]
        %v195 = vld [vmem:[%s117 + $0x1c8] sm:$0xff]
        %v196 = vld [vmem:[%s117 + $0x1d0] sm:$0xff]
        %v197 = vld [vmem:[%s117 + $0x1d8] sm:$0xff]
        %v198 = vld [vmem:[%s117 + $0x1e0] sm:$0xff]
        %v199 = vld [vmem:[%s117 + $0x1e8] sm:$0xff]
        %v200 = vld [vmem:[%s117 + $0x1f0] sm:$0xff]
        %v201 = vld [vmem:[%s117 + $0x1f8] sm:$0xff]
        %v202 = vld [vmem:[%s117 + $0x200] sm:$0xff]
        %v203 = vld [vmem:[%s117 + $0x208] sm:$0xff]
        %v204 = vld [vmem:[%s117 + $0x210] sm:$0xff]
        %v205 = vld [vmem:[%s117 + $0x218] sm:$0xff]
        %v206 = vld [vmem:[%s117 + $0x220] sm:$0xff]
        %v207 = vld [vmem:[%s117 + $0x228] sm:$0xff]
        %v208 = vld [vmem:[%s117 + $0x230] sm:$0xff]
        %v209 = vld [vmem:[%s117 + $0x238] sm:$0xff]
        %v210 = vld [vmem:[%s117 + $0x240] sm:$0xff]
        %v211 = vld [vmem:[%s117 + $0x248] sm:$0xff]
        %v212 = vld [vmem:[%s117 + $0x250] sm:$0xff]
        %v213 = vld [vmem:[%s117 + $0x258] sm:$0xff]
        %v214 = vld [vmem:[%s117 + $0x260] sm:$0xff]
        %v215 = vld [vmem:[%s117 + $0x268] sm:$0xff]
        %v216 = vld [vmem:[%s117 + $0x270] sm:$0xff]
        %v217 = vld [vmem:[%s117 + $0x278] sm:$0xff]
        %v218 = vld [vmem:[%s117 + $0x280] sm:$0xff]
        %v219 = vld [vmem:[%s117 + $0x288] sm:$0xff]
        %v220 = vld [vmem:[%s117 + $0x290] sm:$0xff]
        %v221 = vld [vmem:[%s117 + $0x298] sm:$0xff]
        %v222 = vld [vmem:[%s117 + $0x2a0] sm:$0xff]
        %v223 = vld [vmem:[%s117 + $0x2a8] sm:$0xff]
        %v224 = vld [vmem:[%s117 + $0x2b0] sm:$0xff]
        %v225 = vld [vmem:[%s117 + $0x2b8] sm:$0xff]
        %v226 = vld [vmem:[%s117 + $0x2c0] sm:$0xff]
        %v227 = vld [vmem:[%s117 + $0x2c8] sm:$0xff]
        %v228 = vld [vmem:[%s117 + $0x2d0] sm:$0xff]
        %v229 = vld [vmem:[%s117 + $0x2d8] sm:$0xff]
        %v230 = vld [vmem:[%s117 + $0x2e0] sm:$0xff]
        %v231 = vld [vmem:[%s117 + $0x2e8] sm:$0xff]
        %v232 = vld [vmem:[%s117 + $0x2f0] sm:$0xff]
        %v233 = vld [vmem:[%s117 + $0x2f8] sm:$0xff]
        %v234 = vld [vmem:[%s117 + $0x300] sm:$0xff]
        %v235 = vld [vmem:[%s117 + $0x308] sm:$0xff]
        %v236 = vld [vmem:[%s117 + $0x310] sm:$0xff]
        %v237 = vld [vmem:[%s117 + $0x318] sm:$0xff]
        %v238 = vld [vmem:[%s117 + $0x320] sm:$0xff]
        %v239 = vld [vmem:[%s117 + $0x328] sm:$0xff]
        %v240 = vld [vmem:[%s117 + $0x330] sm:$0xff]
        %v241 = vld [vmem:[%s117 + $0x338] sm:$0xff]
        %v242 = vld [vmem:[%s117 + $0x340] sm:$0xff]
        %v243 = vld [vmem:[%s117 + $0x348] sm:$0xff]
        %v244 = vld [vmem:[%s117 + $0x350] sm:$0xff]
        %v245 = vld [vmem:[%s117 + $0x358] sm:$0xff]
        %v246 = vld [vmem:[%s117 + $0x360] sm:$0xff]
        %v247 = vld [vmem:[%s117 + $0x368] sm:$0xff]
        %v248 = vld [vmem:[%s117 + $0x370] sm:$0xff]
        %v249 = vld [vmem:[%s117 + $0x378] sm:$0xff]
        %v250 = vld [vmem:[%s117 + $0x380] sm:$0xff]
        %v251 = vld [vmem:[%s117 + $0x388] sm:$0xff]
        %v252 = vld [vmem:[%s117 + $0x390] sm:$0xff]
        %v253 = vld [vmem:[%s117 + $0x398] sm:$0xff]
        %v254 = vld [vmem:[%s117 + $0x3a0] sm:$0xff]
        %v255 = vld [vmem:[%s117 + $0x3a8] sm:$0xff]
        %v256 = vld [vmem:[%s117 + $0x3b0] sm:$0xff]
        %v257 = vld [vmem:[%s117 + $0x3b8] sm:$0xff]
        %v258 = vld [vmem:[%s117 + $0x3c0] sm:$0xff]
        %v259 = vld [vmem:[%s117 + $0x3c8] sm:$0xff]
        %v260 = vld [vmem:[%s117 + $0x3d0] sm:$0xff]
        %v261 = vld [vmem:[%s117 + $0x3d8] sm:$0xff]
        %v262 = vld [vmem:[%s117 + $0x3e0] sm:$0xff]
        %v263 = vld [vmem:[%s117 + $0x3e8] sm:$0xff]
        %v264 = vld [vmem:[%s117 + $0x3f0] sm:$0xff]
        %v265 = vld [vmem:[%s117 + $0x3f8] sm:$0xff]
        %v266 = vld [vmem:[%s117 + $0x400] sm:$0xff]
        %v267 = vld [vmem:[%s117 + $0x408] sm:$0xff]
        %v268 = vld [vmem:[%s117 + $0x410] sm:$0xff]
        %v269 = vld [vmem:[%s117 + $0x418] sm:$0xff]
        %v270 = vld [vmem:[%s117 + $0x420] sm:$0xff]
        %v271 = vld [vmem:[%s117 + $0x428] sm:$0xff]
        %v272 = vld [vmem:[%s117 + $0x430] sm:$0xff]
        %v273 = vld [vmem:[%s117 + $0x438] sm:$0xff]
        %v274 = vld [vmem:[%s117 + $0x440] sm:$0xff]
        %v275 = vld [vmem:[%s117 + $0x448] sm:$0xff]
        %v276 = vld [vmem:[%s117 + $0x450] sm:$0xff]
        %v277 = vld [vmem:[%s117 + $0x458] sm:$0xff]
        %v278 = vld [vmem:[%s117 + $0x460] sm:$0xff]
        %v279 = vld [vmem:[%s117 + $0x468] sm:$0xff]
        %v280 = vld [vmem:[%s117 + $0x470] sm:$0xff]
        %v281 = vld [vmem:[%s117 + $0x478] sm:$0xff]
        %v282 = vld [vmem:[%s117 + $0x480] sm:$0xff]
        %v283 = vld [vmem:[%s117 + $0x488] sm:$0xff]
        %v284 = vld [vmem:[%s117 + $0x490] sm:$0xff]
        %v285 = vld [vmem:[%s117 + $0x498] sm:$0xff]
        %v286 = vld [vmem:[%s117 + $0x4a0] sm:$0xff]
        %v287 = vld [vmem:[%s117 + $0x4a8] sm:$0xff]
        %v288 = vld [vmem:[%s117 + $0x4b0] sm:$0xff]
        %v289 = vld [vmem:[%s117 + $0x4b8] sm:$0xff]
        %v290 = vld [vmem:[%s117 + $0x4c0] sm:$0xff]
        %v291 = vld [vmem:[%s117 + $0x4c8] sm:$0xff]
        %v292 = vld [vmem:[%s117 + $0x4d0] sm:$0xff]
        %v293 = vld [vmem:[%s117 + $0x4d8] sm:$0xff]
        %v294 = vld [vmem:[%s117 + $0x4e0] sm:$0xff]
        %v295 = vld [vmem:[%s117 + $0x4e8] sm:$0xff]
        %v296 = vld [vmem:[%s117 + $0x4f0] sm:$0xff]
        %v297 = vld [vmem:[%s117 + $0x4f8] sm:$0xff]
        %v298 = vld [vmem:[%s117 + $0x500] sm:$0xff]
        %v299 = vld [vmem:[%s117 + $0x508] sm:$0xff]
        %v300 = vld [vmem:[%s117 + $0x510] sm:$0xff]
        %v301 = vld [vmem:[%s117 + $0x518] sm:$0xff]
        %v302 = vld [vmem:[%s117 + $0x520] sm:$0xff]
        %v303 = vld [vmem:[%s117 + $0x528] sm:$0xff]
        %v304 = vld [vmem:[%s117 + $0x530] sm:$0xff]
        %v305 = vld [vmem:[%s117 + $0x538] sm:$0xff]
        %v306 = vld [vmem:[%s117 + $0x540] sm:$0xff]
        %v307 = vld [vmem:[%s117 + $0x548] sm:$0xff]
        %v308 = vld [vmem:[%s117 + $0x550] sm:$0xff]
        %v309 = vld [vmem:[%s117 + $0x558] sm:$0xff]
        %v310 = vld [vmem:[%s117 + $0x560] sm:$0xff]
        %v311 = vld [vmem:[%s117 + $0x568] sm:$0xff]
        %v312 = vld [vmem:[%s117 + $0x570] sm:$0xff]
        %v313 = vld [vmem:[%s117 + $0x578] sm:$0xff]
        %v314 = vld [vmem:[%s117 + $0x580] sm:$0xff]
        %v315 = vld [vmem:[%s117 + $0x588] sm:$0xff]
        %v316 = vld [vmem:[%s117 + $0x590] sm:$0xff]
        %v317 = vld [vmem:[%s117 + $0x598] sm:$0xff]
        %v318 = vld [vmem:[%s117 + $0x5a0] sm:$0xff]
        %v319 = vld [vmem:[%s117 + $0x5a8] sm:$0xff]
        %v320 = vld [vmem:[%s117 + $0x5b0] sm:$0xff]
        %v321 = vld [vmem:[%s117 + $0x5b8] sm:$0xff]
        %v322 = vld [vmem:[%s117 + $0x5c0] sm:$0xff]
        %v323 = vld [vmem:[%s117 + $0x5c8] sm:$0xff]
        %v324 = vld [vmem:[%s117 + $0x5d0] sm:$0xff]
        %v325 = vld [vmem:[%s117 + $0x5d8] sm:$0xff]
        %v326 = vld [vmem:[%s117 + $0x5e0] sm:$0xff]
        %v327 = vld [vmem:[%s117 + $0x5e8] sm:$0xff]
        %v328 = vld [vmem:[%s117 + $0x5f0] sm:$0xff]
        %v329 = vld [vmem:[%s117 + $0x5f8] sm:$0xff]
        %v330 = vmax.f32 %v138, 0.0
        %v331 = vmax.f32 %v139, 0.0
        %v332 = vmax.f32 %v140, 0.0
        %v333 = vmax.f32 %v141, 0.0
        %v334 = vmax.f32 %v142, 0.0
        %v335 = vmax.f32 %v143, 0.0
        %v336 = vmax.f32 %v144, 0.0
        %v337 = vmax.f32 %v145, 0.0
        %v338 = vmax.f32 %v146, 0.0
        %v339 = vmax.f32 %v147, 0.0
        %v340 = vmax.f32 %v148, 0.0
        %v341 = vmax.f32 %v149, 0.0
        %v342 = vmax.f32 %v150, 0.0
        %v343 = vmax.f32 %v151, 0.0
        %v344 = vmax.f32 %v152, 0.0
        %v345 = vmax.f32 %v153, 0.0
        %v346 = vmax.f32 %v154, 0.0
        %v347 = vmax.f32 %v155, 0.0
        %v348 = vmax.f32 %v156, 0.0
        %v349 = vmax.f32 %v157, 0.0
        %v350 = vmax.f32 %v158, 0.0
        %v351 = vmax.f32 %v159, 0.0
        %v352 = vmax.f32 %v160, 0.0
        %v353 = vmax.f32 %v161, 0.0
        %v354 = vmax.f32 %v162, 0.0
        %v355 = vmax.f32 %v163, 0.0
        %v356 = vmax.f32 %v164, 0.0
        %v357 = vmax.f32 %v165, 0.0
        %v358 = vmax.f32 %v166, 0.0
        %v359 = vmax.f32 %v167, 0.0
        %v360 = vmax.f32 %v168, 0.0
        %v361 = vmax.f32 %v169, 0.0
        %v362 = vmax.f32 %v170, 0.0
        %v363 = vmax.f32 %v171, 0.0
        %v364 = vmax.f32 %v172, 0.0
        %v365 = vmax.f32 %v173, 0.0
        %v366 = vmax.f32 %v174, 0.0
        %v367 = vmax.f32 %v175, 0.0
        %v368 = vmax.f32 %v176, 0.0
        %v369 = vmax.f32 %v177, 0.0
        %v370 = vmax.f32 %v178, 0.0
        %v371 = vmax.f32 %v179, 0.0
        %v372 = vmax.f32 %v180, 0.0
        %v373 = vmax.f32 %v181, 0.0
        %v374 = vmax.f32 %v182, 0.0
        %v375 = vmax.f32 %v183, 0.0
        %v376 = vmax.f32 %v184, 0.0
        %v377 = vmax.f32 %v185, 0.0
        %v378 = vmax.f32 %v186, 0.0
        %v379 = vmax.f32 %v187, 0.0
        %v380 = vmax.f32 %v188, 0.0
        %v381 = vmax.f32 %v189, 0.0
        %v382 = vmax.f32 %v190, 0.0
        %v383 = vmax.f32 %v191, 0.0
        %v384 = vmax.f32 %v192, 0.0
        %v385 = vmax.f32 %v193, 0.0
        %v386 = vmax.f32 %v194, 0.0
        %v387 = vmax.f32 %v195, 0.0
        %v388 = vmax.f32 %v196, 0.0
        %v389 = vmax.f32 %v197, 0.0
        %v390 = vmax.f32 %v198, 0.0
        %v391 = vmax.f32 %v199, 0.0
        %v392 = vmax.f32 %v200, 0.0
        %v393 = vmax.f32 %v201, 0.0
        %v394 = vmax.f32 %v202, 0.0
        %v395 = vmax.f32 %v203, 0.0
        %v396 = vmax.f32 %v204, 0.0
        %v397 = vmax.f32 %v205, 0.0
        %v398 = vmax.f32 %v206, 0.0
        %v399 = vmax.f32 %v207, 0.0
        %v400 = vmax.f32 %v208, 0.0
        %v401 = vmax.f32 %v209, 0.0
        %v402 = vmax.f32 %v210, 0.0
        %v403 = vmax.f32 %v211, 0.0
        %v404 = vmax.f32 %v212, 0.0
        %v405 = vmax.f32 %v213, 0.0
        %v406 = vmax.f32 %v214, 0.0
        %v407 = vmax.f32 %v215, 0.0
        %v408 = vmax.f32 %v216, 0.0
        %v409 = vmax.f32 %v217, 0.0
        %v410 = vmax.f32 %v218, 0.0
        %v411 = vmax.f32 %v219, 0.0
        %v412 = vmax.f32 %v220, 0.0
        %v413 = vmax.f32 %v221, 0.0
        %v414 = vmax.f32 %v222, 0.0
        %v415 = vmax.f32 %v223, 0.0
        %v416 = vmax.f32 %v224, 0.0
        %v417 = vmax.f32 %v225, 0.0
        %v418 = vmax.f32 %v226, 0.0
        %v419 = vmax.f32 %v227, 0.0
        %v420 = vmax.f32 %v228, 0.0
        %v421 = vmax.f32 %v229, 0.0
        %v422 = vmax.f32 %v230, 0.0
        %v423 = vmax.f32 %v231, 0.0
        %v424 = vmax.f32 %v232, 0.0
        %v425 = vmax.f32 %v233, 0.0
        %v426 = vmax.f32 %v234, 0.0
        %v427 = vmax.f32 %v235, 0.0
        %v428 = vmax.f32 %v236, 0.0
        %v429 = vmax.f32 %v237, 0.0
        %v430 = vmax.f32 %v238, 0.0
        %v431 = vmax.f32 %v239, 0.0
        %v432 = vmax.f32 %v240, 0.0
        %v433 = vmax.f32 %v241, 0.0
        %v434 = vmax.f32 %v242, 0.0
        %v435 = vmax.f32 %v243, 0.0
        %v436 = vmax.f32 %v244, 0.0
        %v437 = vmax.f32 %v245, 0.0
        %v438 = vmax.f32 %v246, 0.0
        %v439 = vmax.f32 %v247, 0.0
        %v440 = vmax.f32 %v248, 0.0
        %v441 = vmax.f32 %v249, 0.0
        %v442 = vmax.f32 %v250, 0.0
        %v443 = vmax.f32 %v251, 0.0
        %v444 = vmax.f32 %v252, 0.0
        %v445 = vmax.f32 %v253, 0.0
        %v446 = vmax.f32 %v254, 0.0
        %v447 = vmax.f32 %v255, 0.0
        %v448 = vmax.f32 %v256, 0.0
        %v449 = vmax.f32 %v257, 0.0
        %v450 = vmax.f32 %v258, 0.0
        %v451 = vmax.f32 %v259, 0.0
        %v452 = vmax.f32 %v260, 0.0
        %v453 = vmax.f32 %v261, 0.0
        %v454 = vmax.f32 %v262, 0.0
        %v455 = vmax.f32 %v263, 0.0
        %v456 = vmax.f32 %v264, 0.0
        %v457 = vmax.f32 %v265, 0.0
        %v458 = vmax.f32 %v266, 0.0
        %v459 = vmax.f32 %v267, 0.0
        %v460 = vmax.f32 %v268, 0.0
        %v461 = vmax.f32 %v269, 0.0
        %v462 = vmax.f32 %v270, 0.0
        %v463 = vmax.f32 %v271, 0.0
        %v464 = vmax.f32 %v272, 0.0
        %v465 = vmax.f32 %v273, 0.0
        %v466 = vmax.f32 %v274, 0.0
        %v467 = vmax.f32 %v275, 0.0
        %v468 = vmax.f32 %v276, 0.0
        %v469 = vmax.f32 %v277, 0.0
        %v470 = vmax.f32 %v278, 0.0
        %v471 = vmax.f32 %v279, 0.0
        %v472 = vmax.f32 %v280, 0.0
        %v473 = vmax.f32 %v281, 0.0
        %v474 = vmax.f32 %v282, 0.0
        %v475 = vmax.f32 %v283, 0.0
        %v476 = vmax.f32 %v284, 0.0
        %v477 = vmax.f32 %v285, 0.0
        %v478 = vmax.f32 %v286, 0.0
        %v479 = vmax.f32 %v287, 0.0
        %v480 = vmax.f32 %v288, 0.0
        %v481 = vmax.f32 %v289, 0.0
        %v482 = vmax.f32 %v290, 0.0
        %v483 = vmax.f32 %v291, 0.0
        %v484 = vmax.f32 %v292, 0.0
        %v485 = vmax.f32 %v293, 0.0
        %v486 = vmax.f32 %v294, 0.0
        %v487 = vmax.f32 %v295, 0.0
        %v488 = vmax.f32 %v296, 0.0
        %v489 = vmax.f32 %v297, 0.0
        %v490 = vmax.f32 %v298, 0.0
        %v491 = vmax.f32 %v299, 0.0
        %v492 = vmax.f32 %v300, 0.0
        %v493 = vmax.f32 %v301, 0.0
        %v494 = vmax.f32 %v302, 0.0
        %v495 = vmax.f32 %v303, 0.0
        %v496 = vmax.f32 %v304, 0.0
        %v497 = vmax.f32 %v305, 0.0
        %v498 = vmax.f32 %v306, 0.0
        %v499 = vmax.f32 %v307, 0.0
        %v500 = vmax.f32 %v308, 0.0
        %v501 = vmax.f32 %v309, 0.0
        %v502 = vmax.f32 %v310, 0.0
        %v503 = vmax.f32 %v311, 0.0
        %v504 = vmax.f32 %v312, 0.0
        %v505 = vmax.f32 %v313, 0.0
        %v506 = vmax.f32 %v314, 0.0
        %v507 = vmax.f32 %v315, 0.0
        %v508 = vmax.f32 %v316, 0.0
        %v509 = vmax.f32 %v317, 0.0
        %v510 = vmax.f32 %v318, 0.0
        %v511 = vmax.f32 %v319, 0.0
        %v512 = vmax.f32 %v320, 0.0
        %v513 = vmax.f32 %v321, 0.0
        %v514 = vmax.f32 %v322, 0.0
        %v515 = vmax.f32 %v323, 0.0
        %v516 = vmax.f32 %v324, 0.0
        %v517 = vmax.f32 %v325, 0.0
        %v518 = vmax.f32 %v326, 0.0
        %v519 = vmax.f32 %v327, 0.0
        %v520 = vmax.f32 %v328, 0.0
        %v521 = vmax.f32 %v329, 0.0
        %522 = vst [vmem:[%s135] sm:$0xff] %v330
        %523 = vst [vmem:[%s135 + $0x8] sm:$0xff] %v331
        %524 = vst [vmem:[%s135 + $0x10] sm:$0xff] %v332
        %525 = vst [vmem:[%s135 + $0x18] sm:$0xff] %v333
        %526 = vst [vmem:[%s135 + $0x20] sm:$0xff] %v334
        %527 = vst [vmem:[%s135 + $0x28] sm:$0xff] %v335
        %528 = vst [vmem:[%s135 + $0x30] sm:$0xff] %v336
        %529 = vst [vmem:[%s135 + $0x38] sm:$0xff] %v337
        %530 = vst [vmem:[%s135 + $0x40] sm:$0xff] %v338
        %531 = vst [vmem:[%s135 + $0x48] sm:$0xff] %v339
        %532 = vst [vmem:[%s135 + $0x50] sm:$0xff] %v340
        %533 = vst [vmem:[%s135 + $0x58] sm:$0xff] %v341
        %534 = vst [vmem:[%s135 + $0x60] sm:$0xff] %v342
        %535 = vst [vmem:[%s135 + $0x68] sm:$0xff] %v343
        %536 = vst [vmem:[%s135 + $0x70] sm:$0xff] %v344
        %537 = vst [vmem:[%s135 + $0x78] sm:$0xff] %v345
        %538 = vst [vmem:[%s135 + $0x80] sm:$0xff] %v346
        %539 = vst [vmem:[%s135 + $0x88] sm:$0xff] %v347
        %540 = vst [vmem:[%s135 + $0x90] sm:$0xff] %v348
        %541 = vst [vmem:[%s135 + $0x98] sm:$0xff] %v349
        %542 = vst [vmem:[%s135 + $0xa0] sm:$0xff] %v350
        %543 = vst [vmem:[%s135 + $0xa8] sm:$0xff] %v351
        %544 = vst [vmem:[%s135 + $0xb0] sm:$0xff] %v352
        %545 = vst [vmem:[%s135 + $0xb8] sm:$0xff] %v353
        %546 = vst [vmem:[%s135 + $0xc0] sm:$0xff] %v354
        %547 = vst [vmem:[%s135 + $0xc8] sm:$0xff] %v355
        %548 = vst [vmem:[%s135 + $0xd0] sm:$0xff] %v356
        %549 = vst [vmem:[%s135 + $0xd8] sm:$0xff] %v357
        %550 = vst [vmem:[%s135 + $0xe0] sm:$0xff] %v358
        %551 = vst [vmem:[%s135 + $0xe8] sm:$0xff] %v359
        %552 = vst [vmem:[%s135 + $0xf0] sm:$0xff] %v360
        %553 = vst [vmem:[%s135 + $0xf8] sm:$0xff] %v361
        %554 = vst [vmem:[%s135 + $0x100] sm:$0xff] %v362
        %555 = vst [vmem:[%s135 + $0x108] sm:$0xff] %v363
        %556 = vst [vmem:[%s135 + $0x110] sm:$0xff] %v364
        %557 = vst [vmem:[%s135 + $0x118] sm:$0xff] %v365
        %558 = vst [vmem:[%s135 + $0x120] sm:$0xff] %v366
        %559 = vst [vmem:[%s135 + $0x128] sm:$0xff] %v367
        %560 = vst [vmem:[%s135 + $0x130] sm:$0xff] %v368
        %561 = vst [vmem:[%s135 + $0x138] sm:$0xff] %v369
        %562 = vst [vmem:[%s135 + $0x140] sm:$0xff] %v370
        %563 = vst [vmem:[%s135 + $0x148] sm:$0xff] %v371
        %564 = vst [vmem:[%s135 + $0x150] sm:$0xff] %v372
        %565 = vst [vmem:[%s135 + $0x158] sm:$0xff] %v373
        %566 = vst [vmem:[%s135 + $0x160] sm:$0xff] %v374
        %567 = vst [vmem:[%s135 + $0x168] sm:$0xff] %v375
        %568 = vst [vmem:[%s135 + $0x170] sm:$0xff] %v376
        %569 = vst [vmem:[%s135 + $0x178] sm:$0xff] %v377
        %570 = vst [vmem:[%s135 + $0x180] sm:$0xff] %v378
        %571 = vst [vmem:[%s135 + $0x188] sm:$0xff] %v379
        %572 = vst [vmem:[%s135 + $0x190] sm:$0xff] %v380
        %573 = vst [vmem:[%s135 + $0x198] sm:$0xff] %v381
        %574 = vst [vmem:[%s135 + $0x1a0] sm:$0xff] %v382
        %575 = vst [vmem:[%s135 + $0x1a8] sm:$0xff] %v383
        %576 = vst [vmem:[%s135 + $0x1b0] sm:$0xff] %v384
        %577 = vst [vmem:[%s135 + $0x1b8] sm:$0xff] %v385
        %578 = vst [vmem:[%s135 + $0x1c0] sm:$0xff] %v386
        %579 = vst [vmem:[%s135 + $0x1c8] sm:$0xff] %v387
        %580 = vst [vmem:[%s135 + $0x1d0] sm:$0xff] %v388
        %581 = vst [vmem:[%s135 + $0x1d8] sm:$0xff] %v389
        %582 = vst [vmem:[%s135 + $0x1e0] sm:$0xff] %v390
        %583 = vst [vmem:[%s135 + $0x1e8] sm:$0xff] %v391
        %584 = vst [vmem:[%s135 + $0x1f0] sm:$0xff] %v392
        %585 = vst [vmem:[%s135 + $0x1f8] sm:$0xff] %v393
        %586 = vst [vmem:[%s135 + $0x200] sm:$0xff] %v394
        %587 = vst [vmem:[%s135 + $0x208] sm:$0xff] %v395
        %588 = vst [vmem:[%s135 + $0x210] sm:$0xff] %v396
        %589 = vst [vmem:[%s135 + $0x218] sm:$0xff] %v397
        %590 = vst [vmem:[%s135 + $0x220] sm:$0xff] %v398
        %591 = vst [vmem:[%s135 + $0x228] sm:$0xff] %v399
        %592 = vst [vmem:[%s135 + $0x230] sm:$0xff] %v400
        %593 = vst [vmem:[%s135 + $0x238] sm:$0xff] %v401
        %594 = vst [vmem:[%s135 + $0x240] sm:$0xff] %v402
        %595 = vst [vmem:[%s135 + $0x248] sm:$0xff] %v403
        %596 = vst [vmem:[%s135 + $0x250] sm:$0xff] %v404
        %597 = vst [vmem:[%s135 + $0x258] sm:$0xff] %v405
        %598 = vst [vmem:[%s135 + $0x260] sm:$0xff] %v406
        %599 = vst [vmem:[%s135 + $0x268] sm:$0xff] %v407
        %600 = vst [vmem:[%s135 + $0x270] sm:$0xff] %v408
        %601 = vst [vmem:[%s135 + $0x278] sm:$0xff] %v409
        %602 = vst [vmem:[%s135 + $0x280] sm:$0xff] %v410
        %603 = vst [vmem:[%s135 + $0x288] sm:$0xff] %v411
        %604 = vst [vmem:[%s135 + $0x290] sm:$0xff] %v412
        %605 = vst [vmem:[%s135 + $0x298] sm:$0xff] %v413
        %606 = vst [vmem:[%s135 + $0x2a0] sm:$0xff] %v414
        %607 = vst [vmem:[%s135 + $0x2a8] sm:$0xff] %v415
        %608 = vst [vmem:[%s135 + $0x2b0] sm:$0xff] %v416
        %609 = vst [vmem:[%s135 + $0x2b8] sm:$0xff] %v417
        %610 = vst [vmem:[%s135 + $0x2c0] sm:$0xff] %v418
        %611 = vst [vmem:[%s135 + $0x2c8] sm:$0xff] %v419
        %612 = vst [vmem:[%s135 + $0x2d0] sm:$0xff] %v420
        %613 = vst [vmem:[%s135 + $0x2d8] sm:$0xff] %v421
        %614 = vst [vmem:[%s135 + $0x2e0] sm:$0xff] %v422
        %615 = vst [vmem:[%s135 + $0x2e8] sm:$0xff] %v423
        %616 = vst [vmem:[%s135 + $0x2f0] sm:$0xff] %v424
        %617 = vst [vmem:[%s135 + $0x2f8] sm:$0xff] %v425
        %618 = vst [vmem:[%s135 + $0x300] sm:$0xff] %v426
        %619 = vst [vmem:[%s135 + $0x308] sm:$0xff] %v427
        %620 = vst [vmem:[%s135 + $0x310] sm:$0xff] %v428
        %621 = vst [vmem:[%s135 + $0x318] sm:$0xff] %v429
        %622 = vst [vmem:[%s135 + $0x320] sm:$0xff] %v430
        %623 = vst [vmem:[%s135 + $0x328] sm:$0xff] %v431
        %624 = vst [vmem:[%s135 + $0x330] sm:$0xff] %v432
        %625 = vst [vmem:[%s135 + $0x338] sm:$0xff] %v433
        %626 = vst [vmem:[%s135 + $0x340] sm:$0xff] %v434
        %627 = vst [vmem:[%s135 + $0x348] sm:$0xff] %v435
        %628 = vst [vmem:[%s135 + $0x350] sm:$0xff] %v436
        %629 = vst [vmem:[%s135 + $0x358] sm:$0xff] %v437
        %630 = vst [vmem:[%s135 + $0x360] sm:$0xff] %v438
        %631 = vst [vmem:[%s135 + $0x368] sm:$0xff] %v439
        %632 = vst [vmem:[%s135 + $0x370] sm:$0xff] %v440
        %633 = vst [vmem:[%s135 + $0x378] sm:$0xff] %v441
        %634 = vst [vmem:[%s135 + $0x380] sm:$0xff] %v442
        %635 = vst [vmem:[%s135 + $0x388] sm:$0xff] %v443
        %636 = vst [vmem:[%s135 + $0x390] sm:$0xff] %v444
        %637 = vst [vmem:[%s135 + $0x398] sm:$0xff] %v445
        %638 = vst [vmem:[%s135 + $0x3a0] sm:$0xff] %v446
        %639 = vst [vmem:[%s135 + $0x3a8] sm:$0xff] %v447
        %640 = vst [vmem:[%s135 + $0x3b0] sm:$0xff] %v448
        %641 = vst [vmem:[%s135 + $0x3b8] sm:$0xff] %v449
        %642 = vst [vmem:[%s135 + $0x3c0] sm:$0xff] %v450
        %643 = vst [vmem:[%s135 + $0x3c8] sm:$0xff] %v451
        %644 = vst [vmem:[%s135 + $0x3d0] sm:$0xff] %v452
        %645 = vst [vmem:[%s135 + $0x3d8] sm:$0xff] %v453
        %646 = vst [vmem:[%s135 + $0x3e0] sm:$0xff] %v454
        %647 = vst [vmem:[%s135 + $0x3e8] sm:$0xff] %v455
        %648 = vst [vmem:[%s135 + $0x3f0] sm:$0xff] %v456
        %649 = vst [vmem:[%s135 + $0x3f8] sm:$0xff] %v457
        %650 = vst [vmem:[%s135 + $0x400] sm:$0xff] %v458
        %651 = vst [vmem:[%s135 + $0x408] sm:$0xff] %v459
        %652 = vst [vmem:[%s135 + $0x410] sm:$0xff] %v460
        %653 = vst [vmem:[%s135 + $0x418] sm:$0xff] %v461
        %654 = vst [vmem:[%s135 + $0x420] sm:$0xff] %v462
        %655 = vst [vmem:[%s135 + $0x428] sm:$0xff] %v463
        %656 = vst [vmem:[%s135 + $0x430] sm:$0xff] %v464
        %657 = vst [vmem:[%s135 + $0x438] sm:$0xff] %v465
        %658 = vst [vmem:[%s135 + $0x440] sm:$0xff] %v466
        %659 = vst [vmem:[%s135 + $0x448] sm:$0xff] %v467
        %660 = vst [vmem:[%s135 + $0x450] sm:$0xff] %v468
        %661 = vst [vmem:[%s135 + $0x458] sm:$0xff] %v469
        %662 = vst [vmem:[%s135 + $0x460] sm:$0xff] %v470
        %663 = vst [vmem:[%s135 + $0x468] sm:$0xff] %v471
        %664 = vst [vmem:[%s135 + $0x470] sm:$0xff] %v472
        %665 = vst [vmem:[%s135 + $0x478] sm:$0xff] %v473
        %666 = vst [vmem:[%s135 + $0x480] sm:$0xff] %v474
        %667 = vst [vmem:[%s135 + $0x488] sm:$0xff] %v475
        %668 = vst [vmem:[%s135 + $0x490] sm:$0xff] %v476
        %669 = vst [vmem:[%s135 + $0x498] sm:$0xff] %v477
        %670 = vst [vmem:[%s135 + $0x4a0] sm:$0xff] %v478
        %671 = vst [vmem:[%s135 + $0x4a8] sm:$0xff] %v479
        %672 = vst [vmem:[%s135 + $0x4b0] sm:$0xff] %v480
        %673 = vst [vmem:[%s135 + $0x4b8] sm:$0xff] %v481
        %674 = vst [vmem:[%s135 + $0x4c0] sm:$0xff] %v482
        %675 = vst [vmem:[%s135 + $0x4c8] sm:$0xff] %v483
        %676 = vst [vmem:[%s135 + $0x4d0] sm:$0xff] %v484
        %677 = vst [vmem:[%s135 + $0x4d8] sm:$0xff] %v485
        %678 = vst [vmem:[%s135 + $0x4e0] sm:$0xff] %v486
        %679 = vst [vmem:[%s135 + $0x4e8] sm:$0xff] %v487
        %680 = vst [vmem:[%s135 + $0x4f0] sm:$0xff] %v488
        %681 = vst [vmem:[%s135 + $0x4f8] sm:$0xff] %v489
        %682 = vst [vmem:[%s135 + $0x500] sm:$0xff] %v490
        %683 = vst [vmem:[%s135 + $0x508] sm:$0xff] %v491
        %684 = vst [vmem:[%s135 + $0x510] sm:$0xff] %v492
        %685 = vst [vmem:[%s135 + $0x518] sm:$0xff] %v493
        %686 = vst [vmem:[%s135 + $0x520] sm:$0xff] %v494
        %687 = vst [vmem:[%s135 + $0x528] sm:$0xff] %v495
        %688 = vst [vmem:[%s135 + $0x530] sm:$0xff] %v496
        %689 = vst [vmem:[%s135 + $0x538] sm:$0xff] %v497
        %690 = vst [vmem:[%s135 + $0x540] sm:$0xff] %v498
        %691 = vst [vmem:[%s135 + $0x548] sm:$0xff] %v499
        %692 = vst [vmem:[%s135 + $0x550] sm:$0xff] %v500
        %693 = vst [vmem:[%s135 + $0x558] sm:$0xff] %v501
        %694 = vst [vmem:[%s135 + $0x560] sm:$0xff] %v502
        %695 = vst [vmem:[%s135 + $0x568] sm:$0xff] %v503
        %696 = vst [vmem:[%s135 + $0x570] sm:$0xff] %v504
        %697 = vst [vmem:[%s135 + $0x578] sm:$0xff] %v505
        %698 = vst [vmem:[%s135 + $0x580] sm:$0xff] %v506
        %699 = vst [vmem:[%s135 + $0x588] sm:$0xff] %v507
        %700 = vst [vmem:[%s135 + $0x590] sm:$0xff] %v508
        %701 = vst [vmem:[%s135 + $0x598] sm:$0xff] %v509
        %702 = vst [vmem:[%s135 + $0x5a0] sm:$0xff] %v510
        %703 = vst [vmem:[%s135 + $0x5a8] sm:$0xff] %v511
        %704 = vst [vmem:[%s135 + $0x5b0] sm:$0xff] %v512
        %705 = vst [vmem:[%s135 + $0x5b8] sm:$0xff] %v513
        %706 = vst [vmem:[%s135 + $0x5c0] sm:$0xff] %v514
        %707 = vst [vmem:[%s135 + $0x5c8] sm:$0xff] %v515
        %708 = vst [vmem:[%s135 + $0x5d0] sm:$0xff] %v516
        %709 = vst [vmem:[%s135 + $0x5d8] sm:$0xff] %v517
        %710 = vst [vmem:[%s135 + $0x5e0] sm:$0xff] %v518
        %711 = vst [vmem:[%s135 + $0x5e8] sm:$0xff] %v519
        %712 = vst [vmem:[%s135 + $0x5f0] sm:$0xff] %v520
        %713 = vst [vmem:[%s135 + $0x5f8] sm:$0xff] %v521
        %s714 = sand.u32 %s52, 1
        %s715 = scalar_lea.sflag [#allocation4], %s714
        %s716 = sand.u32 %s52, 1
        %s717 = smul.addr %s716, 1536
        %s718 = scalar_lea.vmem [#allocation5], %s717
        // Predicated region
        $region29: #{tpu_custom_call.1} parent=23 // pred_check
          %p719 = pneg %p62
        $region30: #{tpu_custom_call.1} parent=23 // pred_check_branch
          %721 = sbr.rel (%p719) target = $region32
        $region31: #{tpu_custom_call.1} parent=23 // pred_region
          %s722 = smul.u32 64, %s18
          %s724 = ssub.s32 24576, 24576
          %725 = vsyncadd %s715, %s724
          %s726 = smul.addr %s722, 3
          %s727 = smul.addr %s726, 128
          %s728 = scalar_lea.hbm %s1, %s727
          %s729 = sshll.u32 %s718, 4
          %s730 = int_to_ptr.vmem [resolvable:$true] %s729
          %735 = dma.vmem_to_hbm [thread:$0]  %s730, 24576, %s728, %s715, 384, 384, 24
        $region32: #{tpu_custom_call.1} parent=23 // pred_fallthru
          _
      $region24: #{tpu_custom_call.1} parent=5 // pred_fallthru
        _
      %p736 = scmp.le.s32.totalorder 2, %s13
      // Predicated region
      $region33: #{tpu_custom_call.1} parent=5 // pred_check
        %p737 = pneg %p736
      $region34: #{tpu_custom_call.1} parent=5 // pred_check_branch
        %739 = sbr.rel (%p737) target = $region36
      $region35: #{tpu_custom_call.1} parent=5 // pred_region
        %s740 = ssub.s32 %s13, 2
        // Predicated region
        $region37: #{tpu_custom_call.1} parent=35 // pred_check
          %p741 = pneg %p68
        $region38: #{tpu_custom_call.1} parent=35 // pred_check_branch
          %743 = sbr.rel (%p741) target = $region40
        $region39: #{tpu_custom_call.1} parent=35 // pred_region
          %s744 = sand.u32 %s53, 1
          %s745 = scalar_lea.sflag [#allocation4], %s744
          %s746 = sand.u32 %s53, 1
          %s747 = smul.addr %s746, 1536
          %s748 = scalar_lea.vmem [#allocation5], %s747
          %749 = dma.done %s745, 24576
        $region40: #{tpu_custom_call.1} parent=35 // pred_fallthru
          _
      $region36: #{tpu_custom_call.1} parent=5 // pred_fallthru
        _
    $region6: #{tpu_custom_call.1} parent=1 // loop_footer
      %s17 = sadd.s32 1, %s13
    $region7: #{tpu_custom_call.1} parent=1 // loop_footer_branch
      %12 = sbr.rel target = $region3
    $region8: #{tpu_custom_call.1} parent=1 // loop_exit
      _
    %750 = vsyncpa [#allocation3], 1
    %s751 = scalar_lea.sflag [#allocation3], 1
    %752 = vsyncpa %s751, 1
    %753 = vsyncpa [#allocation4], 1
    %s754 = scalar_lea.sflag [#allocation4], 1
    %755 = vsyncpa %s754, 1

</llo_original>
